<compile_context>
chip_gen: v5e
topology: v5e:2x2
jax: 0.10.0
libtpu: 0.0.40
codegen_flags: <defaults>
</compile_context>

<pallas_src>
import functools

import jax
import jax.numpy as jnp
from jax.experimental import pallas as pl
from jax.experimental.pallas import tpu as pltpu


def _lsce_kernel(x_ref, t_ref, out_ref, *, smoothing, ignore_index, n_rows):
    i = pl.program_id(0)

    x = x_ref[...].astype(jnp.float32)          # (TM, C) f32 in-register
    t = t_ref[...]                              # (TM, 1) int32
    tm, c = x.shape

    # Row validity: mask rows past the end of the (possibly ragged) array and
    # rows whose target equals ignore_index.  Use jnp.where (not multiply) so
    # garbage in padded rows can never leak NaN/Inf into the partial sums.
    row = jax.lax.broadcasted_iota(jnp.int32, (tm, 1), 0) + i * tm
    valid = (row < n_rows) & (t != ignore_index)            # (TM, 1) bool

    # log-softmax statistics WITHOUT materializing the full logp tile.
    m = jnp.max(x, axis=1, keepdims=True)                   # (TM, 1)
    xs = x - m                                              # (TM, C)
    lse = jnp.log(jnp.sum(jnp.exp(xs), axis=1, keepdims=True))   # (TM, 1)
    sum_xs = jnp.sum(xs, axis=1, keepdims=True)             # (TM, 1)
    sum_logp = sum_xs - c * lse                             # sum_j logp[j]

    # logp at the target index via a one-hot built from a lane iota.
    col = jax.lax.broadcasted_iota(jnp.int32, x.shape, 1)   # (TM, C)
    xs_t = jnp.sum(jnp.where(col == t, xs, 0.0), axis=1, keepdims=True)
    logp_t = xs_t - lse                                     # (TM, 1)

    smooth_val = smoothing / c
    row_loss = -(smooth_val * sum_logp
                 + (1.0 - smoothing - smooth_val) * logp_t)  # (TM, 1)

    num_p = jnp.sum(jnp.where(valid, row_loss, 0.0), axis=0, keepdims=True)  # (1,1)
    den_p = jnp.sum(jnp.where(valid, 1.0, 0.0), axis=0, keepdims=True)       # (1,1)

    # Lane-dense partial output tile: sub-row 0 = num partial, sub-row 1 = den.
    sel = jax.lax.broadcasted_iota(jnp.int32, (1, 2, 128), 1)
    out_ref[...] = jnp.where(sel == 0, num_p, den_p)


def _pick_block_rows(n_rows, n_classes, x_itemsize,
                     vmem_usage_budget=20 * 1024 * 1024):
    """Largest row tile that keeps double-buffered blocks + f32 temps in budget."""
    per_row = (2 * n_classes * x_itemsize    # double-buffered input block (native dtype)
               + 3 * n_classes * 4           # ~3 tile-sized f32 temporaries in-kernel
               + 2 * 128 * 4)                # double-buffered (TM,1) int32 targets, lane-padded
    rows = vmem_usage_budget // per_row
    rows = max(8, min(int(rows), 1024))
    rows = (rows // 8) * 8
    # Never use a tile taller than the (8-rounded-down) row count.
    rows = min(rows, max(8, (n_rows // 8) * 8))
    return int(rows)


def label_smooth_cross_entropy(x, target, *, smoothing=0.1, ignore_index=-100,
                               reduction="mean", block_rows=None,
                               vmem_limit_bytes=32 * 1024 * 1024):
    """Label-smoothed cross entropy. x: (N, C) float, target: (N,) int."""
    if smoothing < 0.0 or smoothing > 1.0:
        raise ValueError("invalid smoothing value: {}".format(smoothing))
    if reduction not in ("mean", "sum"):
        # TODO(synk): reduction='none' needs a per-row loss output path.
        raise ValueError("unsupported reduction: {}".format(reduction))

    N, C = x.shape
    if block_rows is None:
        block_rows = _pick_block_rows(N, C, jnp.dtype(x.dtype).itemsize)
    grid = pl.cdiv(N, block_rows)

    t2d = target.astype(jnp.int32).reshape(N, 1)

    kernel = functools.partial(_lsce_kernel,
                               smoothing=float(smoothing),
                               ignore_index=int(ignore_index),
                               n_rows=int(N))

    partials = pl.pallas_call(
        kernel,
        out_shape=jax.ShapeDtypeStruct((grid, 2, 128), jnp.float32),
        grid_spec=pltpu.PrefetchScalarGridSpec(
            num_scalar_prefetch=0,
            grid=(grid,),
            in_specs=[
                pl.BlockSpec((block_rows, C), lambda i: (i, 0)),
                pl.BlockSpec((block_rows, 1), lambda i: (i, 0)),
            ],
            out_specs=pl.BlockSpec((1, 2, 128), lambda i: (i, 0, 0)),
        ),
        compiler_params=pltpu.CompilerParams(
            dimension_semantics=("parallel",),
            vmem_limit_bytes=int(vmem_limit_bytes)),
    )(x, t2d)

    num = jnp.sum(partials[:, 0, 0])
    den = jnp.sum(partials[:, 1, 0])
    if reduction == "sum":
        return num
    return num / den


def _reference(x, target, smoothing=0.1, ignore_index=-100):
    x = x.astype(jnp.float32)
    N, C = x.shape
    logp = jax.nn.log_softmax(x, axis=1)
    smooth_val = smoothing / C
    onehot = jax.nn.one_hot(target, C, dtype=jnp.float32)
    target_logit = jnp.full((N, C), smooth_val, jnp.float32)
    target_logit = target_logit * (1.0 - onehot) + onehot * (1.0 - smoothing)
    result = -(target_logit * logp).sum(axis=1)
    mask = (target != ignore_index).astype(jnp.float32)
    return (result * mask).sum() / mask.sum()


if __name__ == "__main__":
    key = jax.random.PRNGKey(0)
    k1, k2, k3, k4 = jax.random.split(key, 4)

    # Test 1: small aligned case (8 samples, 32 classes), one ignored row.
    N, C = 8, 32
    x = jax.random.normal(k1, (N, C), dtype=jnp.float32)
    target = jax.random.randint(k2, (N,), 0, C, dtype=jnp.int32)
    target = target.at[3].set(-100)

    loss = label_smooth_cross_entropy(x, target, smoothing=0.1, ignore_index=-100)
    loss = jax.block_until_ready(loss)
    ref = _reference(x, target, smoothing=0.1, ignore_index=-100)
    assert jnp.allclose(loss, ref, atol=1e-4, rtol=1e-4), (loss, ref)

    # Test 2: ragged N (exercises cdiv grid + row masking) with bf16 logits.
    N2, C2 = 13, 40
    x2 = jax.random.normal(k3, (N2, C2), dtype=jnp.bfloat16)
    target2 = jax.random.randint(k4, (N2,), 0, C2, dtype=jnp.int32)
    target2 = target2.at[5].set(-100)

    loss2 = label_smooth_cross_entropy(x2, target2, smoothing=0.1,
                                       ignore_index=-100)
    loss2 = jax.block_until_ready(loss2)
    ref2 = _reference(x2, target2, smoothing=0.1, ignore_index=-100)
    assert jnp.allclose(loss2, ref2, atol=1e-4, rtol=1e-4), (loss2, ref2)

    print("KERNEL_OK")
</pallas_src>

<mosaic_0001>
module attributes {stable_mosaic.version = 11 : i64} {
  func.func @_lsce_kernel(%arg0: i32, %arg1: memref<8x32xf32, #tpu.memory_space<vmem>>, %arg2: memref<8x1xi32, #tpu.memory_space<vmem>>, %arg3: memref<1x2x128xf32, #tpu.memory_space<vmem>>) attributes {dimension_semantics = [#tpu.dimension_semantics<parallel>], iteration_bounds = array<i64: 1>, scalar_prefetch = 0 : i64, scratch_operands = 0 : i64, tpu.core_type = #tpu.core_type<tc>, window_params = [{transform_indices = @transform_0, window_bounds = array<i64: 8, 32>}, {transform_indices = @transform_1, window_bounds = array<i64: 8, 1>}, {transform_indices = @transform_2, window_bounds = array<i64: 1, 2, 128>}]} {
    %c0 = arith.constant 0 : index
    %c0_0 = arith.constant 0 : index
    %0 = vector.load %arg1[%c0, %c0_0] : memref<8x32xf32, #tpu.memory_space<vmem>>, vector<8x32xf32>
    %c0_1 = arith.constant 0 : index
    %c0_2 = arith.constant 0 : index
    %1 = vector.load %arg2[%c0_1, %c0_2] : memref<8x1xi32, #tpu.memory_space<vmem>>, vector<8x1xi32>
    %2 = tpu.iota {dimensions = array<i32: 0>} : vector<8x1xi32>
    %c8_i32 = arith.constant 8 : i32
    %3 = arith.muli %arg0, %c8_i32 : i32
    %4 = vector.broadcast %3 : i32 to vector<8x1xi32>
    %5 = arith.addi %2, %4 : vector<8x1xi32>
    %c8_i32_3 = arith.constant 8 : i32
    %6 = vector.broadcast %c8_i32_3 : i32 to vector<8x1xi32>
    %7 = arith.cmpi slt, %5, %6 : vector<8x1xi32>
    %c-100_i32 = arith.constant -100 : i32
    %8 = vector.broadcast %c-100_i32 : i32 to vector<8x1xi32>
    %9 = arith.cmpi ne, %1, %8 : vector<8x1xi32>
    %10 = arith.andi %7, %9 : vector<8x1xi1>
    %cst = arith.constant dense<0xFF800000> : vector<8xf32>
    %11 = vector.multi_reduction <maximumf>, %0, %cst [1] : vector<8x32xf32> to vector<8xf32>
    %12 = vector.shape_cast %11 : vector<8xf32> to vector<8x1xf32>
    %13 = vector.broadcast %12 : vector<8x1xf32> to vector<8x32xf32>
    %14 = arith.subf %0, %13 : vector<8x32xf32>
    %15 = math.exp %14 : vector<8x32xf32>
    %cst_4 = arith.constant dense<0.000000e+00> : vector<8xf32>
    %16 = vector.multi_reduction <add>, %15, %cst_4 [1] : vector<8x32xf32> to vector<8xf32>
    %17 = vector.shape_cast %16 : vector<8xf32> to vector<8x1xf32>
    %18 = math.log %17 : vector<8x1xf32>
    %cst_5 = arith.constant dense<0.000000e+00> : vector<8xf32>
    %19 = vector.multi_reduction <add>, %14, %cst_5 [1] : vector<8x32xf32> to vector<8xf32>
    %20 = vector.shape_cast %19 : vector<8xf32> to vector<8x1xf32>
    %cst_6 = arith.constant 3.200000e+01 : f32
    %21 = vector.broadcast %cst_6 : f32 to vector<8x1xf32>
    %22 = arith.mulf %21, %18 : vector<8x1xf32>
    %23 = arith.subf %20, %22 : vector<8x1xf32>
    %24 = tpu.iota {dimensions = array<i32: 1>} : vector<8x32xi32>
    %25 = vector.broadcast %1 : vector<8x1xi32> to vector<8x32xi32>
    %26 = arith.cmpi eq, %24, %25 : vector<8x32xi32>
    %cst_7 = arith.constant 0.000000e+00 : f32
    %27 = vector.broadcast %cst_7 : f32 to vector<8x32xf32>
    %28 = arith.select %26, %14, %27 : vector<8x32xi1>, vector<8x32xf32>
    %cst_8 = arith.constant dense<0.000000e+00> : vector<8xf32>
    %29 = vector.multi_reduction <add>, %28, %cst_8 [1] : vector<8x32xf32> to vector<8xf32>
    %30 = vector.shape_cast %29 : vector<8xf32> to vector<8x1xf32>
    %31 = arith.subf %30, %18 : vector<8x1xf32>
    %cst_9 = arith.constant 3.125000e-03 : f32
    %32 = vector.broadcast %cst_9 : f32 to vector<8x1xf32>
    %33 = arith.mulf %32, %23 : vector<8x1xf32>
    %cst_10 = arith.constant 8.968750e-01 : f32
    %34 = vector.broadcast %cst_10 : f32 to vector<8x1xf32>
    %35 = arith.mulf %34, %31 : vector<8x1xf32>
    %36 = arith.addf %33, %35 : vector<8x1xf32>
    %cst_11 = arith.constant 0.000000e+00 : f32
    %37 = vector.broadcast %cst_11 : f32 to vector<8x1xf32>
    %38 = arith.subf %37, %36 : vector<8x1xf32>
    %cst_12 = arith.constant 0.000000e+00 : f32
    %39 = vector.broadcast %cst_12 : f32 to vector<8x1xf32>
    %40 = arith.select %10, %38, %39 : vector<8x1xi1>, vector<8x1xf32>
    %cst_13 = arith.constant dense<0.000000e+00> : vector<1xf32>
    %41 = vector.multi_reduction <add>, %40, %cst_13 [0] : vector<8x1xf32> to vector<1xf32>
    %42 = vector.shape_cast %41 : vector<1xf32> to vector<1x1xf32>
    %cst_14 = arith.constant 1.000000e+00 : f32
    %cst_15 = arith.constant 0.000000e+00 : f32
    %43 = vector.broadcast %cst_14 : f32 to vector<8x1xf32>
    %44 = vector.broadcast %cst_15 : f32 to vector<8x1xf32>
    %45 = arith.select %10, %43, %44 : vector<8x1xi1>, vector<8x1xf32>
    %cst_16 = arith.constant dense<0.000000e+00> : vector<1xf32>
    %46 = vector.multi_reduction <add>, %45, %cst_16 [0] : vector<8x1xf32> to vector<1xf32>
    %47 = vector.shape_cast %46 : vector<1xf32> to vector<1x1xf32>
    %48 = tpu.iota {dimensions = array<i32: 1>} : vector<1x2x128xi32>
    %c0_i32 = arith.constant 0 : i32
    %49 = vector.broadcast %c0_i32 : i32 to vector<1x2x128xi32>
    %50 = arith.cmpi eq, %48, %49 : vector<1x2x128xi32>
    %51 = vector.shape_cast %42 : vector<1x1xf32> to vector<1x1x1xf32>
    %52 = vector.broadcast %51 : vector<1x1x1xf32> to vector<1x2x128xf32>
    %53 = vector.shape_cast %47 : vector<1x1xf32> to vector<1x1x1xf32>
    %54 = vector.broadcast %53 : vector<1x1x1xf32> to vector<1x2x128xf32>
    %55 = arith.select %50, %52, %54 : vector<1x2x128xi1>, vector<1x2x128xf32>
    %c0_17 = arith.constant 0 : index
    %c0_18 = arith.constant 0 : index
    %c0_19 = arith.constant 0 : index
    %56 = vector.load %arg3[%c0_17, %c0_18, %c0_19] : memref<1x2x128xf32, #tpu.memory_space<vmem>>, vector<1x2x128xf32>
    tpu.vector_store %arg3[%c0_17, %c0_18, %c0_19], %55 {strides = array<i32>} : memref<1x2x128xf32, #tpu.memory_space<vmem>>, vector<1x2x128xf32>,
    return
  }
  func.func @transform_0(%arg0: i32) -> (i32, i32) {
    %c0_i32 = arith.constant 0 : i32
    %c0_i32_0 = arith.constant 0 : i32
    return %arg0, %c0_i32 : i32, i32
  }
  func.func @transform_1(%arg0: i32) -> (i32, i32) {
    %c0_i32 = arith.constant 0 : i32
    %c0_i32_0 = arith.constant 0 : i32
    return %arg0, %c0_i32 : i32, i32
  }
  func.func @transform_2(%arg0: i32) -> (i32, i32, i32) {
    %c0_i32 = arith.constant 0 : i32
    %c0_i32_0 = arith.constant 0 : i32
    %c0_i32_1 = arith.constant 0 : i32
    return %arg0, %c0_i32, %c0_i32_0 : i32, i32, i32
  }
}

</mosaic_0001>

<llo_original>
// kernel: tpu_custom_call.1
$region0: #{tpu_custom_call.1}
  #allocation0 [shape = 'u32[]', space=smem, size = 0x4, offset = 0x4, fixed_abs, tag = 'smem constant byte address 0x4 - core index']
  #allocation1 [shape = 'u32[72,128]{1,0:T(1,128)}', space=vmem, size = 0x9000, scoped, tag = 'internal scratch']
  %s0 = inlined_call_operand.vmem [shape: f32[8,32], index: 0, kind: input, shape index: {}]
  %s1 = inlined_call_operand.vmem [shape: s32[8,1], index: 1, kind: input, shape index: {}]
  %s2 = inlined_call_operand.hbm [shape: f32[1,2,128], index: 2, kind: output, shape index: {}]
  %s3 = sld [smem:[#allocation0]]
  $region18: #{tpu_custom_call.1} parent=0
    _
  %s5 = ssub.s32 1, %s3
  %s6 = scalar_select 0, %s5, %s3
  $region1: #{tpu_custom_call.1} parent=0
    #allocation2 [shape = 'u8[1024]{0}', space=vmem, size = 0x400, scoped, tag = 'output window, operand 0, single buffered']
    #allocation3 [shape = 's32[1]{0}', space=sflag, size = 0x4, scoped, tag = 'scoped memory for tpu_custom_call.1']
    %7 = vsyncpa [#allocation3], 0
    // Predicated region
    $region2: #{tpu_custom_call.1} parent=1 // pred_check
      _
    $region3: #{tpu_custom_call.1} parent=1 // pred_check_branch
      %9 = sbr.rel (0) target = $region5
    $region4: #{tpu_custom_call.1} parent=1 // pred_region
      _
    $region5: #{tpu_custom_call.1} parent=1 // pred_fallthru
      _
    // Predicated region
    $region6: #{tpu_custom_call.1} parent=1 // pred_check
      _
    $region7: #{tpu_custom_call.1} parent=1 // pred_check_branch
      %11 = sbr.rel (0) target = $region9
    $region8: #{tpu_custom_call.1} parent=1 // pred_region
      _
    $region9: #{tpu_custom_call.1} parent=1 // pred_fallthru
      _
    %v12 = vld [vmem:[%s0] sm:$0xff]
    %v13 = vld [vmem:[%s1] sm:$0xff]
    %v14 = vlaneseq
    %v15 = vshrl.u32 %v14, 7
    %s16 = smul.u32 0, 8
    %v17 = vstv %s16
    %v18 = vadd.s32 %v15, %v17
    %vm19 = vcmp.lt.s32.totalorder %v18, 8
    %vm20 = vcmp.ne.s32.totalorder %v13, 4294967196
    %vm21 = vmand %vm19, %vm20
    %vm22 = vcmask 261120
    %v23 = vsel %vm22, %v12, -inf
    %24 = vmax.xlane.f32.xlu0 %v23
    %v25 = vpop.xlane.xlu0 %24
    %v26 = vsub.f32 %v12, %v25
    %v27 = vmul.f32 %v26, 1.442695
    %v28 = vpow.pop %v27
    %v29 = vsel %vm22, %v28, 0.0
    %30 = vadd.xlane.f32.xlu0 %v29
    %v31 = vpop.xlane.xlu0 %30
    %v32 = vlog2.pop %v31
    %v33 = vmul.f32 %v32, 0.6931472
    %v34 = vsel %vm22, %v26, 0.0
    %35 = vadd.xlane.f32.xlu0 %v34
    %v36 = vpop.xlane.xlu0 %35
    %v37 = vmul.f32 %v33, 32.0
    %v38 = vsub.f32 %v36, %v37
    %v39 = vlaneseq
    %v40 = vand.u32 %v39, 127
    %41 = vset.pattern.permute.xlu0 0
    %42 = vperm.xlu0 %41, %v13
    %v43 = vpop.permute.xlu0 %42
    %vm44 = vcmp.eq.s32.totalorder %v40, %v43
    %v45 = vsel %vm44, %v26, 0.0
    %v46 = vsel %vm22, %v45, 0.0
    %47 = vadd.xlane.f32.xlu0 %v46
    %v48 = vpop.xlane.xlu0 %47
    %v49 = vsub.f32 %v48, %v33
    %v50 = vmul.f32 %v38, 0.003125
    %v51 = vmul.f32 %v49, 0.896875
    %v52 = vadd.f32 %v50, %v51
    %v53 = vsub.f32 0.0, %v52
    %v54 = vsel %vm21, %v53, 0.0
    %vm55 = vcmask 7168
    %v56 = vsel %vm55, %v54, 0.0
    %v57 = vrot.slane %v56, 4
    %v58 = vadd.f32 %v56, %v57
    %v59 = vrot.slane %v58, 2
    %v60 = vadd.f32 %v58, %v59
    %v61 = vrot.slane %v60, 1
    %v62 = vadd.f32 %v60, %v61
    %v63 = vsel %vm21, 1.0, 0.0
    %v64 = vsel %vm55, %v63, 0.0
    %v65 = vrot.slane %v64, 4
    %v66 = vadd.f32 %v64, %v65
    %v67 = vrot.slane %v66, 2
    %v68 = vadd.f32 %v66, %v67
    %v69 = vrot.slane %v68, 1
    %v70 = vadd.f32 %v68, %v69
    %vm71 = vcmp.eq.s32.totalorder %v15, 0
    %73 = vset.pattern.permute.xlu0 0
    %74 = vperm.xlu0 %73, %v62
    %v75 = vpop.permute.xlu0 %74
    %78 = vset.pattern.permute.xlu0 0
    %79 = vperm.xlu0 %78, %v70
    %v80 = vpop.permute.xlu0 %79
    %v82 = vsel %vm71, %v75, %v80
    %83 = vst [vmem:[#allocation2] sm:$0x3] %v82
    // Predicated region
    $region10: #{tpu_custom_call.1} parent=1 // pred_check
      _
    $region11: #{tpu_custom_call.1} parent=1 // pred_check_branch
      %85 = sbr.rel (0) target = $region13
    $region12: #{tpu_custom_call.1} parent=1 // pred_region
      %87 = vsyncadd [#allocation3], 0
      %s89 = sshll.u32 [#allocation2], 4
      %s90 = int_to_ptr.vmem [resolvable:$true] %s89
      %s91 = sshll.u32 %s2, 4
      %s92 = int_to_ptr.hbm [resolvable:$true] %s91
      %94 = dma.vmem_to_hbm [thread:$0]  %s90, 32, %s92, [#allocation3]
    $region13: #{tpu_custom_call.1} parent=1 // pred_fallthru
      _
    // Predicated region
    $region14: #{tpu_custom_call.1} parent=1 // pred_check
      _
    $region15: #{tpu_custom_call.1} parent=1 // pred_check_branch
      %96 = sbr.rel (0) target = $region17
    $region16: #{tpu_custom_call.1} parent=1 // pred_region
      %98 = dma.done [#allocation3], 32
    $region17: #{tpu_custom_call.1} parent=1 // pred_fallthru
      _
    %99 = vsyncpa [#allocation3], 1

</llo_original>
